<compile_context>
chip_gen: v6e
topology: v6e:2x2x1
jax: 0.10.0
libtpu: 0.0.40
codegen_flags: <defaults>
</compile_context>

<pallas_src>
import functools

import jax
import jax.numpy as jnp
from jax.experimental import pallas as pl
from jax.experimental.pallas import tpu as pltpu


def _round_up(x: int, m: int) -> int:
    return ((x + m - 1) // m) * m


def make_qnet_kernel(state_dim: int, action_dim: int, fc1_on_vpu: bool):
    def kernel(x_ref, w1_ref, b1_ref, w2_ref, b2_ref, w3_ref, b3_ref, o_ref):
        # ---- fc1 + ReLU ----
        if fc1_on_vpu:
            # K = state_dim is tiny: K broadcast multiply-adds on the (otherwise idle)
            # VPU beat an MXU fill/drain round trip.  All VPU math in f32.
            x = x_ref[...].astype(jnp.float32)
            w1 = w1_ref[...].astype(jnp.float32)
            h1 = x[:, 0:1] * w1[0:1, :]
            for k in range(1, state_dim):
                h1 = h1 + x[:, k:k + 1] * w1[k:k + 1, :]
        else:
            h1 = jnp.dot(x_ref[...], w1_ref[...], preferred_element_type=jnp.float32)
        h1 = jnp.maximum(h1 + b1_ref[...].astype(jnp.float32), 0.0)

        # ---- fc2 + ReLU ---- (bf16 MXU inputs, f32 accumulation)
        h2 = jnp.dot(h1.astype(w2_ref.dtype), w2_ref[...],
                     preferred_element_type=jnp.float32)
        h2 = jnp.maximum(h2 + b2_ref[...].astype(jnp.float32), 0.0)

        # ---- fc_out ---- (weights lane-padded to 128 for the MXU; slice the real
        # action_dim columns in-register so the HBM store is only (tb, action_dim)).
        out = jnp.dot(h2.astype(w3_ref.dtype), w3_ref[...],
                      preferred_element_type=jnp.float32)
        out = out + b3_ref[...].astype(jnp.float32)
        o_ref[...] = out[:, :action_dim].astype(o_ref.dtype)

    return kernel


def prepare_params(w1, b1, w2, b2, w3, b3, *, pad_lanes: int = 128):
    """One-time param prep: 2-D biases, fc_out weight/bias zero-padded to MXU lanes."""
    def as_row(b):
        b = jnp.asarray(b)
        assert b.ndim in (1, 2), "bias must be 1-D or (1, N)"
        return b.reshape(1, -1)

    b1, b2, b3 = as_row(b1), as_row(b2), as_row(b3)
    hidden, action_dim = w3.shape
    a_pad = _round_up(max(action_dim, pad_lanes), pad_lanes)
    w3_p = jnp.zeros((hidden, a_pad), w3.dtype).at[:, :action_dim].set(w3)
    b3_p = jnp.zeros((1, a_pad), b3.dtype).at[:, :action_dim].set(b3)
    return (w1, b1, w2, b2, w3_p, b3_p), action_dim


@functools.partial(jax.jit, static_argnames=("action_dim", "batch_tile"))
def qnetwork_forward(x, w1, b1, w2, b2, w3_p, b3_p, *,
                     action_dim: int, batch_tile: int = 512):
    batch, state_dim = x.shape
    hidden = w1.shape[1]

    # Grid selection (feedback #2/#3):
    #  * batch <= 1024: one grid step, tb = round_up(batch, 8) -> no per-step overhead,
    #    no duplicated weight DMA across megacore TCs.
    #  * larger batches: tile at `batch_tile` (default 512, the measured sweet spot)
    #    and mark the axis "parallel" so v7x shards steps across both TensorCores.
    if batch <= 1024:
        tb = _round_up(batch, 8)
    else:
        tb = min(_round_up(batch_tile, 8), 1024)
    b_pad = _round_up(batch, tb)
    x_p = x if b_pad == batch else jnp.pad(x, ((0, b_pad - batch), (0, 0)))
    grid = (b_pad // tb,)
    semantics = ("parallel",) if grid[0] > 1 else ("arbitrary",)

    def resident(shape):  # weights/biases: same block every step -> VMEM-resident
        return pl.BlockSpec(shape, lambda i: (0, 0))

    in_specs = [
        pl.BlockSpec((tb, state_dim), lambda i: (i, 0)),   # x tile (pipelined)
        resident(w1.shape), resident(b1.shape),
        resident(w2.shape), resident(b2.shape),
        resident(w3_p.shape), resident(b3_p.shape),
    ]
    # Output block last dim == full array last dim (== action_dim) -> legal block shape;
    # writes only the real action columns (masked vst, same bundle count as 128 lanes).
    out_specs = pl.BlockSpec((tb, action_dim), lambda i: (i, 0))

    param_bytes = sum(int(a.size) * a.dtype.itemsize
                      for a in (w1, b1, w2, b2, w3_p, b3_p))
    cost = pl.CostEstimate(
        flops=2 * b_pad * (state_dim * hidden + hidden * hidden + hidden * action_dim),
        transcendentals=0,
        bytes_accessed=int(x_p.size) * x_p.dtype.itemsize
                       + b_pad * action_dim * 4 + param_bytes,
    )

    out = pl.pallas_call(
        make_qnet_kernel(state_dim, action_dim, fc1_on_vpu=state_dim <= 8),
        out_shape=jax.ShapeDtypeStruct((b_pad, action_dim), jnp.float32),
        grid=grid,
        in_specs=in_specs,
        out_specs=out_specs,
        compiler_params=pltpu.CompilerParams(dimension_semantics=semantics),
        cost_estimate=cost,
    )(x_p, w1, b1, w2, b2, w3_p, b3_p)

    return out if b_pad == batch else out[:batch]


def init_params(key, state_dim, action_dim, hidden_dim):
    # Deterministic synthetic init (mimics PyTorch Linear's uniform fan-in init).
    ks = jax.random.split(key, 6)

    def lin(kw, kb, fan_in, fan_out):
        bound = 1.0 / jnp.sqrt(fan_in)
        w = jax.random.uniform(kw, (fan_in, fan_out), jnp.float32, -bound, bound)
        b = jax.random.uniform(kb, (1, fan_out), jnp.float32, -bound, bound)
        return w, b

    w1, b1 = lin(ks[0], ks[1], state_dim, hidden_dim)
    w2, b2 = lin(ks[2], ks[3], hidden_dim, hidden_dim)
    w3, b3 = lin(ks[4], ks[5], hidden_dim, action_dim)
    return w1, b1, w2, b2, w3, b3


if __name__ == "__main__":
    key = jax.random.PRNGKey(0)
    batch, state_dim, action_dim, hidden_dim = 64, 4, 2, 128

    kx, kp = jax.random.split(key)
    x_f32 = jax.random.normal(kx, (batch, state_dim), jnp.float32)
    params_f32 = init_params(kp, state_dim, action_dim, hidden_dim)

    # bf16 storage for activations/weights; the kernel accumulates in f32.
    x = x_f32.astype(jnp.bfloat16)
    w1, b1, w2, b2, w3, b3 = (p.astype(jnp.bfloat16) for p in params_f32)

    # One-time param prep (lane-padding of fc_out) -- outside the per-call path.
    (w1p, b1p, w2p, b2p, w3p, b3p), adim = prepare_params(w1, b1, w2, b2, w3, b3)

    out = qnetwork_forward(x, w1p, b1p, w2p, b2p, w3p, b3p, action_dim=adim)
    out = jax.block_until_ready(out)

    # Reference in plain JAX, mirroring the kernel's bf16-storage / f32-accumulate scheme.
    f32 = jnp.float32
    h1 = jnp.maximum(
        jnp.dot(x.astype(f32), w1.astype(f32), preferred_element_type=f32)
        + b1.astype(f32), 0.0)
    h2 = jnp.maximum(
        jnp.dot(h1.astype(jnp.bfloat16), w2, preferred_element_type=f32)
        + b2.astype(f32), 0.0)
    ref = (jnp.dot(h2.astype(jnp.bfloat16), w3, preferred_element_type=f32)
           + b3.astype(f32))

    assert out.shape == (batch, action_dim), out.shape
    err = float(jnp.max(jnp.abs(out - ref)))
    assert jnp.allclose(out, ref, atol=1e-2, rtol=1e-2), err

    print("KERNEL_OK")
</pallas_src>

<mosaic_0001>
module attributes {stable_mosaic.version = 11 : i64} {
  func.func @kernel(%arg0: i32, %arg1: memref<64x4xbf16, #tpu.memory_space<vmem>>, %arg2: memref<4x128xbf16, #tpu.memory_space<vmem>>, %arg3: memref<1x128xbf16, #tpu.memory_space<vmem>>, %arg4: memref<128x128xbf16, #tpu.memory_space<vmem>>, %arg5: memref<1x128xbf16, #tpu.memory_space<vmem>>, %arg6: memref<128x128xbf16, #tpu.memory_space<vmem>>, %arg7: memref<1x128xbf16, #tpu.memory_space<vmem>>, %arg8: memref<64x2xf32, #tpu.memory_space<vmem>>) attributes {dimension_semantics = [#tpu.dimension_semantics<arbitrary>], iteration_bounds = array<i64: 1>, scalar_prefetch = 0 : i64, scratch_operands = 0 : i64, tpu.core_type = #tpu.core_type<tc>, window_params = [{transform_indices = @transform_0, window_bounds = array<i64: 64, 4>}, {pipeline_mode = #tpu.pipeline_mode<synchronous>, transform_indices = @transform_1, window_bounds = array<i64: 4, 128>}, {pipeline_mode = #tpu.pipeline_mode<synchronous>, transform_indices = @transform_2, window_bounds = array<i64: 1, 128>}, {pipeline_mode = #tpu.pipeline_mode<synchronous>, transform_indices = @transform_3, window_bounds = array<i64: 128, 128>}, {pipeline_mode = #tpu.pipeline_mode<synchronous>, transform_indices = @transform_4, window_bounds = array<i64: 1, 128>}, {pipeline_mode = #tpu.pipeline_mode<synchronous>, transform_indices = @transform_5, window_bounds = array<i64: 128, 128>}, {pipeline_mode = #tpu.pipeline_mode<synchronous>, transform_indices = @transform_6, window_bounds = array<i64: 1, 128>}, {transform_indices = @transform_7, window_bounds = array<i64: 64, 2>}]} {
    %c0 = arith.constant 0 : index
    %c0_0 = arith.constant 0 : index
    %0 = vector.load %arg1[%c0, %c0_0] : memref<64x4xbf16, #tpu.memory_space<vmem>>, vector<64x4xbf16>
    %1 = arith.extf %0 : vector<64x4xbf16> to vector<64x4xf32>
    %c0_1 = arith.constant 0 : index
    %c0_2 = arith.constant 0 : index
    %2 = vector.load %arg2[%c0_1, %c0_2] : memref<4x128xbf16, #tpu.memory_space<vmem>>, vector<4x128xbf16>
    %3 = arith.extf %2 : vector<4x128xbf16> to vector<4x128xf32>
    %4 = vector.extract_strided_slice %1 {offsets = [0, 0], sizes = [64, 1], strides = [1, 1]} : vector<64x4xf32> to vector<64x1xf32>
    %5 = vector.extract_strided_slice %3 {offsets = [0, 0], sizes = [1, 128], strides = [1, 1]} : vector<4x128xf32> to vector<1x128xf32>
    %6 = vector.broadcast %4 : vector<64x1xf32> to vector<64x128xf32>
    %7 = vector.broadcast %5 : vector<1x128xf32> to vector<64x128xf32>
    %8 = arith.mulf %6, %7 : vector<64x128xf32>
    %9 = vector.extract_strided_slice %1 {offsets = [0, 1], sizes = [64, 1], strides = [1, 1]} : vector<64x4xf32> to vector<64x1xf32>
    %10 = vector.extract_strided_slice %3 {offsets = [1, 0], sizes = [1, 128], strides = [1, 1]} : vector<4x128xf32> to vector<1x128xf32>
    %11 = vector.broadcast %9 : vector<64x1xf32> to vector<64x128xf32>
    %12 = vector.broadcast %10 : vector<1x128xf32> to vector<64x128xf32>
    %13 = arith.mulf %11, %12 : vector<64x128xf32>
    %14 = arith.addf %8, %13 : vector<64x128xf32>
    %15 = vector.extract_strided_slice %1 {offsets = [0, 2], sizes = [64, 1], strides = [1, 1]} : vector<64x4xf32> to vector<64x1xf32>
    %16 = vector.extract_strided_slice %3 {offsets = [2, 0], sizes = [1, 128], strides = [1, 1]} : vector<4x128xf32> to vector<1x128xf32>
    %17 = vector.broadcast %15 : vector<64x1xf32> to vector<64x128xf32>
    %18 = vector.broadcast %16 : vector<1x128xf32> to vector<64x128xf32>
    %19 = arith.mulf %17, %18 : vector<64x128xf32>
    %20 = arith.addf %14, %19 : vector<64x128xf32>
    %21 = vector.extract_strided_slice %1 {offsets = [0, 3], sizes = [64, 1], strides = [1, 1]} : vector<64x4xf32> to vector<64x1xf32>
    %22 = vector.extract_strided_slice %3 {offsets = [3, 0], sizes = [1, 128], strides = [1, 1]} : vector<4x128xf32> to vector<1x128xf32>
    %23 = vector.broadcast %21 : vector<64x1xf32> to vector<64x128xf32>
    %24 = vector.broadcast %22 : vector<1x128xf32> to vector<64x128xf32>
    %25 = arith.mulf %23, %24 : vector<64x128xf32>
    %26 = arith.addf %20, %25 : vector<64x128xf32>
    %c0_3 = arith.constant 0 : index
    %c0_4 = arith.constant 0 : index
    %27 = vector.load %arg3[%c0_3, %c0_4] : memref<1x128xbf16, #tpu.memory_space<vmem>>, vector<1x128xbf16>
    %28 = arith.extf %27 : vector<1x128xbf16> to vector<1x128xf32>
    %29 = vector.broadcast %28 : vector<1x128xf32> to vector<64x128xf32>
    %30 = arith.addf %26, %29 : vector<64x128xf32>
    %cst = arith.constant 0.000000e+00 : f32
    %31 = vector.broadcast %cst : f32 to vector<64x128xf32>
    %32 = arith.maximumf %30, %31 : vector<64x128xf32>
    %33 = arith.truncf %32 : vector<64x128xf32> to vector<64x128xbf16>
    %c0_5 = arith.constant 0 : index
    %c0_6 = arith.constant 0 : index
    %34 = vector.load %arg4[%c0_5, %c0_6] : memref<128x128xbf16, #tpu.memory_space<vmem>>, vector<128x128xbf16>
    %cst_7 = arith.constant dense<0.000000e+00> : vector<64x128xf32>
    %35 = tpu.matmul %33, %34, %cst_7 {dimension_numbers = #tpu.dot_dimension_numbers<[1], [0], [0], [1], [0, 0, 1, 1], [], []>} : vector<64x128xbf16>, vector<128x128xbf16>, vector<64x128xf32> -> vector<64x128xf32>
    %c0_8 = arith.constant 0 : index
    %c0_9 = arith.constant 0 : index
    %36 = vector.load %arg5[%c0_8, %c0_9] : memref<1x128xbf16, #tpu.memory_space<vmem>>, vector<1x128xbf16>
    %37 = arith.extf %36 : vector<1x128xbf16> to vector<1x128xf32>
    %38 = vector.broadcast %37 : vector<1x128xf32> to vector<64x128xf32>
    %39 = arith.addf %35, %38 : vector<64x128xf32>
    %cst_10 = arith.constant 0.000000e+00 : f32
    %40 = vector.broadcast %cst_10 : f32 to vector<64x128xf32>
    %41 = arith.maximumf %39, %40 : vector<64x128xf32>
    %42 = arith.truncf %41 : vector<64x128xf32> to vector<64x128xbf16>
    %c0_11 = arith.constant 0 : index
    %c0_12 = arith.constant 0 : index
    %43 = vector.load %arg6[%c0_11, %c0_12] : memref<128x128xbf16, #tpu.memory_space<vmem>>, vector<128x128xbf16>
    %cst_13 = arith.constant dense<0.000000e+00> : vector<64x128xf32>
    %44 = tpu.matmul %42, %43, %cst_13 {dimension_numbers = #tpu.dot_dimension_numbers<[1], [0], [0], [1], [0, 0, 1, 1], [], []>} : vector<64x128xbf16>, vector<128x128xbf16>, vector<64x128xf32> -> vector<64x128xf32>
    %c0_14 = arith.constant 0 : index
    %c0_15 = arith.constant 0 : index
    %45 = vector.load %arg7[%c0_14, %c0_15] : memref<1x128xbf16, #tpu.memory_space<vmem>>, vector<1x128xbf16>
    %46 = arith.extf %45 : vector<1x128xbf16> to vector<1x128xf32>
    %47 = vector.broadcast %46 : vector<1x128xf32> to vector<64x128xf32>
    %48 = arith.addf %44, %47 : vector<64x128xf32>
    %49 = vector.extract_strided_slice %48 {offsets = [0, 0], sizes = [64, 2], strides = [1, 1]} : vector<64x128xf32> to vector<64x2xf32>
    %c0_16 = arith.constant 0 : index
    %c0_17 = arith.constant 0 : index
    %50 = vector.load %arg8[%c0_16, %c0_17] : memref<64x2xf32, #tpu.memory_space<vmem>>, vector<64x2xf32>
    tpu.vector_store %arg8[%c0_16, %c0_17], %49 {strides = array<i32>} : memref<64x2xf32, #tpu.memory_space<vmem>>, vector<64x2xf32>,
    return
  }
  func.func @transform_0(%arg0: i32) -> (i32, i32) {
    %c0_i32 = arith.constant 0 : i32
    %c0_i32_0 = arith.constant 0 : i32
    return %arg0, %c0_i32 : i32, i32
  }
  func.func @transform_1(%arg0: i32) -> (i32, i32) {
    %c0_i32 = arith.constant 0 : i32
    %c0_i32_0 = arith.constant 0 : i32
    %c0_i32_1 = arith.constant 0 : i32
    return %c0_i32, %c0_i32_0 : i32, i32
  }
  func.func @transform_2(%arg0: i32) -> (i32, i32) {
    %c0_i32 = arith.constant 0 : i32
    %c0_i32_0 = arith.constant 0 : i32
    %c0_i32_1 = arith.constant 0 : i32
    return %c0_i32, %c0_i32_0 : i32, i32
  }
  func.func @transform_3(%arg0: i32) -> (i32, i32) {
    %c0_i32 = arith.constant 0 : i32
    %c0_i32_0 = arith.constant 0 : i32
    %c0_i32_1 = arith.constant 0 : i32
    return %c0_i32, %c0_i32_0 : i32, i32
  }
  func.func @transform_4(%arg0: i32) -> (i32, i32) {
    %c0_i32 = arith.constant 0 : i32
    %c0_i32_0 = arith.constant 0 : i32
    %c0_i32_1 = arith.constant 0 : i32
    return %c0_i32, %c0_i32_0 : i32, i32
  }
  func.func @transform_5(%arg0: i32) -> (i32, i32) {
    %c0_i32 = arith.constant 0 : i32
    %c0_i32_0 = arith.constant 0 : i32
    %c0_i32_1 = arith.constant 0 : i32
    return %c0_i32, %c0_i32_0 : i32, i32
  }
  func.func @transform_6(%arg0: i32) -> (i32, i32) {
    %c0_i32 = arith.constant 0 : i32
    %c0_i32_0 = arith.constant 0 : i32
    %c0_i32_1 = arith.constant 0 : i32
    return %c0_i32, %c0_i32_0 : i32, i32
  }
  func.func @transform_7(%arg0: i32) -> (i32, i32) {
    %c0_i32 = arith.constant 0 : i32
    %c0_i32_0 = arith.constant 0 : i32
    return %arg0, %c0_i32 : i32, i32
  }
}

</mosaic_0001>

<llo_original>
// kernel: qnetwork_forward.1
$region0: #{qnetwork_forward.1}
  #allocation0 [shape = 'u32[]', space=smem, size = 0x4, offset = 0x4, fixed_abs, tag = 'smem constant byte address 0x4 - core index']
  #allocation1 [shape = 'u32[144,128]{1,0:T(1,128)}', space=vmem, size = 0x12000, scoped, tag = 'internal scratch']
  %s0 = inlined_call_operand.vmem [shape: bf16[64,4], index: 0, kind: input, shape index: {}]
  %s1 = inlined_call_operand.vmem [shape: bf16[4,128], index: 1, kind: input, shape index: {}]
  %s2 = inlined_call_operand.vmem [shape: bf16[1,128], index: 2, kind: input, shape index: {}]
  %s3 = inlined_call_operand.hbm [shape: bf16[128,128], index: 3, kind: input, shape index: {}]
  %s4 = inlined_call_operand.vmem [shape: bf16[1,128], index: 4, kind: input, shape index: {}]
  %s5 = inlined_call_operand.hbm [shape: bf16[128,128], index: 5, kind: input, shape index: {}]
  %s6 = inlined_call_operand.vmem [shape: bf16[1,128], index: 6, kind: input, shape index: {}]
  %s7 = inlined_call_operand.vmem [shape: f32[64,2], index: 7, kind: output, shape index: {}]
  %s8 = sld [smem:[#allocation0]]
  $region46: #{qnetwork_forward.1} parent=0
    _
  %s10 = ssub.s32 1, %s8
  %s11 = scalar_select 0, %s10, %s8
  $region1: #{qnetwork_forward.1} parent=0
    #allocation2 [shape = 'u8[32768]{0}', space=vmem, size = 0x8000, scoped, tag = 'input window, operand 3, single buffered']
    #allocation3 [shape = 's32[1]{0}', space=sflag, size = 0x4, scoped, tag = 'scoped memory for qnetwork_forward.1']
    #allocation4 [shape = 'u8[32768]{0}', space=vmem, size = 0x8000, scoped, tag = 'input window, operand 5, single buffered']
    #allocation5 [shape = 's32[1]{0}', space=sflag, size = 0x4, scoped, tag = 'scoped memory for qnetwork_forward.1']
    %12 = vsyncpa [#allocation3], 0
    %13 = vsyncpa [#allocation5], 0
    // Predicated region
    $region2: #{qnetwork_forward.1} parent=1 // pred_check
      _
    $region3: #{qnetwork_forward.1} parent=1 // pred_check_branch
      %15 = sbr.rel (0) target = $region5
    $region4: #{qnetwork_forward.1} parent=1 // pred_region
      _
    $region5: #{qnetwork_forward.1} parent=1 // pred_fallthru
      _
    // Predicated region
    $region6: #{qnetwork_forward.1} parent=1 // pred_check
      _
    $region7: #{qnetwork_forward.1} parent=1 // pred_check_branch
      %17 = sbr.rel (0) target = $region9
    $region8: #{qnetwork_forward.1} parent=1 // pred_region
      _
    $region9: #{qnetwork_forward.1} parent=1 // pred_fallthru
      _
    // Predicated region
    $region10: #{qnetwork_forward.1} parent=1 // pred_check
      _
    $region11: #{qnetwork_forward.1} parent=1 // pred_check_branch
      %19 = sbr.rel (0) target = $region13
    $region12: #{qnetwork_forward.1} parent=1 // pred_region
      _
    $region13: #{qnetwork_forward.1} parent=1 // pred_fallthru
      _
    // Predicated region
    $region14: #{qnetwork_forward.1} parent=1 // pred_check
      _
    $region15: #{qnetwork_forward.1} parent=1 // pred_check_branch
      %21 = sbr.rel (0) target = $region17
    $region16: #{qnetwork_forward.1} parent=1 // pred_region
      %s23 = ssub.s32 1024, 1024
      %24 = vsyncadd [#allocation3], %s23
      %s25 = sshll.u32 [#allocation2], 4
      %s26 = int_to_ptr.vmem [resolvable:$true] %s25
      %31 = dma.hbm_to_vmem [thread:$0]  %s3, 1024, %s26, [#allocation3], 64, 64, 4
    $region17: #{qnetwork_forward.1} parent=1 // pred_fallthru
      _
    // Predicated region
    $region18: #{qnetwork_forward.1} parent=1 // pred_check
      _
    $region19: #{qnetwork_forward.1} parent=1 // pred_check_branch
      %33 = sbr.rel (0) target = $region21
    $region20: #{qnetwork_forward.1} parent=1 // pred_region
      _
    $region21: #{qnetwork_forward.1} parent=1 // pred_fallthru
      _
    // Predicated region
    $region22: #{qnetwork_forward.1} parent=1 // pred_check
      _
    $region23: #{qnetwork_forward.1} parent=1 // pred_check_branch
      %35 = sbr.rel (0) target = $region25
    $region24: #{qnetwork_forward.1} parent=1 // pred_region
      %s37 = ssub.s32 1024, 1024
      %38 = vsyncadd [#allocation5], %s37
      %s39 = sshll.u32 [#allocation4], 4
      %s40 = int_to_ptr.vmem [resolvable:$true] %s39
      %45 = dma.hbm_to_vmem [thread:$0]  %s5, 1024, %s40, [#allocation5], 64, 64, 4
    $region25: #{qnetwork_forward.1} parent=1 // pred_fallthru
      _
    // Predicated region
    $region26: #{qnetwork_forward.1} parent=1 // pred_check
      _
    $region27: #{qnetwork_forward.1} parent=1 // pred_check_branch
      %47 = sbr.rel (0) target = $region29
    $region28: #{qnetwork_forward.1} parent=1 // pred_region
      _
    $region29: #{qnetwork_forward.1} parent=1 // pred_fallthru
      _
    // Predicated region
    $region30: #{qnetwork_forward.1} parent=1 // pred_check
      _
    $region31: #{qnetwork_forward.1} parent=1 // pred_check_branch
      %49 = sbr.rel (0) target = $region33
    $region32: #{qnetwork_forward.1} parent=1 // pred_region
      %50 = dma.done [#allocation3], 1024
    $region33: #{qnetwork_forward.1} parent=1 // pred_fallthru
      _
    // Predicated region
    $region34: #{qnetwork_forward.1} parent=1 // pred_check
      _
    $region35: #{qnetwork_forward.1} parent=1 // pred_check_branch
      %52 = sbr.rel (0) target = $region37
    $region36: #{qnetwork_forward.1} parent=1 // pred_region
      %53 = dma.done [#allocation5], 1024
    $region37: #{qnetwork_forward.1} parent=1 // pred_fallthru
      _
    %v55 = vld [vmem:[%s0] sm:$0xf]
    %v56 = vld [vmem:[%s0 + $0x4] sm:$0xf]
    %v57 = vld [vmem:[%s0 + $0x8] sm:$0xf]
    %v58 = vld [vmem:[%s0 + $0xc] sm:$0xf]
    %v59 = vld [vmem:[%s0 + $0x10] sm:$0xf]
    %v60 = vld [vmem:[%s0 + $0x14] sm:$0xf]
    %v61 = vld [vmem:[%s0 + $0x18] sm:$0xf]
    %v62 = vld [vmem:[%s0 + $0x1c] sm:$0xf]
    %v63 = vunpack.c.l.bf16 %v55
    %v64 = vunpack.c.l.bf16 %v56
    %v65 = vunpack.c.l.bf16 %v57
    %v66 = vunpack.c.l.bf16 %v58
    %v67 = vunpack.c.l.bf16 %v59
    %v68 = vunpack.c.l.bf16 %v60
    %v69 = vunpack.c.l.bf16 %v61
    %v70 = vunpack.c.l.bf16 %v62
    %v71 = vld [vmem:[%s1] sm:$0x3]
    %v72 = vunpack.c.l.bf16 %v71
    %74 = vset.pattern.permute.xlu0 0
    %75 = vperm.xlu0 %74, %v63
    %v76 = vpop.permute.xlu0 %75
    %79 = vset.pattern.permute.xlu0 0
    %80 = vperm.xlu0 %79, %v64
    %v81 = vpop.permute.xlu0 %80
    %84 = vset.pattern.permute.xlu0 0
    %85 = vperm.xlu0 %84, %v65
    %v86 = vpop.permute.xlu0 %85
    %89 = vset.pattern.permute.xlu0 0
    %90 = vperm.xlu0 %89, %v66
    %v91 = vpop.permute.xlu0 %90
    %94 = vset.pattern.permute.xlu0 0
    %95 = vperm.xlu0 %94, %v67
    %v96 = vpop.permute.xlu0 %95
    %99 = vset.pattern.permute.xlu0 0
    %100 = vperm.xlu0 %99, %v68
    %v101 = vpop.permute.xlu0 %100
    %104 = vset.pattern.permute.xlu0 0
    %105 = vperm.xlu0 %104, %v69
    %v106 = vpop.permute.xlu0 %105
    %109 = vset.pattern.permute.xlu0 0
    %110 = vperm.xlu0 %109, %v70
    %v111 = vpop.permute.xlu0 %110
    %v113 = vlaneseq
    %v114 = vshrl.u32 %v113, 7
    %v115 = vsub.s32 0, %v114
    %v116 = vrot.slane %v72, %v115
    %v117 = vmul.f32 %v76, %v116
    %v118 = vmul.f32 %v81, %v116
    %v119 = vmul.f32 %v86, %v116
    %v120 = vmul.f32 %v91, %v116
    %v121 = vmul.f32 %v96, %v116
    %v122 = vmul.f32 %v101, %v116
    %v123 = vmul.f32 %v106, %v116
    %v124 = vmul.f32 %v111, %v116
    %125 = vset.pattern.permute.xlu0 1
    %126 = vperm.xlu0 %125, %v63
    %v127 = vpop.permute.xlu0 %126
    %129 = vset.pattern.permute.xlu0 1
    %130 = vperm.xlu0 %129, %v64
    %v131 = vpop.permute.xlu0 %130
    %133 = vset.pattern.permute.xlu0 1
    %134 = vperm.xlu0 %133, %v65
    %v135 = vpop.permute.xlu0 %134
    %137 = vset.pattern.permute.xlu0 1
    %138 = vperm.xlu0 %137, %v66
    %v139 = vpop.permute.xlu0 %138
    %141 = vset.pattern.permute.xlu0 1
    %142 = vperm.xlu0 %141, %v67
    %v143 = vpop.permute.xlu0 %142
    %145 = vset.pattern.permute.xlu0 1
    %146 = vperm.xlu0 %145, %v68
    %v147 = vpop.permute.xlu0 %146
    %149 = vset.pattern.permute.xlu0 1
    %150 = vperm.xlu0 %149, %v69
    %v151 = vpop.permute.xlu0 %150
    %153 = vset.pattern.permute.xlu0 1
    %154 = vperm.xlu0 %153, %v70
    %v155 = vpop.permute.xlu0 %154
    %v157 = vlaneseq
    %v158 = vshrl.u32 %v157, 7
    %v159 = vsub.s32 1, %v158
    %v160 = vrot.slane %v72, %v159
    %v161 = vmul.f32 %v127, %v160
    %v162 = vmul.f32 %v131, %v160
    %v163 = vmul.f32 %v135, %v160
    %v164 = vmul.f32 %v139, %v160
    %v165 = vmul.f32 %v143, %v160
    %v166 = vmul.f32 %v147, %v160
    %v167 = vmul.f32 %v151, %v160
    %v168 = vmul.f32 %v155, %v160
    %v169 = vadd.f32 %v117, %v161
    %v170 = vadd.f32 %v118, %v162
    %v171 = vadd.f32 %v119, %v163
    %v172 = vadd.f32 %v120, %v164
    %v173 = vadd.f32 %v121, %v165
    %v174 = vadd.f32 %v122, %v166
    %v175 = vadd.f32 %v123, %v167
    %v176 = vadd.f32 %v124, %v168
    %177 = vset.pattern.permute.xlu0 2
    %178 = vperm.xlu0 %177, %v63
    %v179 = vpop.permute.xlu0 %178
    %181 = vset.pattern.permute.xlu0 2
    %182 = vperm.xlu0 %181, %v64
    %v183 = vpop.permute.xlu0 %182
    %185 = vset.pattern.permute.xlu0 2
    %186 = vperm.xlu0 %185, %v65
    %v187 = vpop.permute.xlu0 %186
    %189 = vset.pattern.permute.xlu0 2
    %190 = vperm.xlu0 %189, %v66
    %v191 = vpop.permute.xlu0 %190
    %193 = vset.pattern.permute.xlu0 2
    %194 = vperm.xlu0 %193, %v67
    %v195 = vpop.permute.xlu0 %194
    %197 = vset.pattern.permute.xlu0 2
    %198 = vperm.xlu0 %197, %v68
    %v199 = vpop.permute.xlu0 %198
    %201 = vset.pattern.permute.xlu0 2
    %202 = vperm.xlu0 %201, %v69
    %v203 = vpop.permute.xlu0 %202
    %205 = vset.pattern.permute.xlu0 2
    %206 = vperm.xlu0 %205, %v70
    %v207 = vpop.permute.xlu0 %206
    %v209 = vlaneseq
    %v210 = vshrl.u32 %v209, 7
    %v211 = vsub.s32 2, %v210
    %v212 = vrot.slane %v72, %v211
    %v213 = vmul.f32 %v179, %v212
    %v214 = vmul.f32 %v183, %v212
    %v215 = vmul.f32 %v187, %v212
    %v216 = vmul.f32 %v191, %v212
    %v217 = vmul.f32 %v195, %v212
    %v218 = vmul.f32 %v199, %v212
    %v219 = vmul.f32 %v203, %v212
    %v220 = vmul.f32 %v207, %v212
    %v221 = vadd.f32 %v169, %v213
    %v222 = vadd.f32 %v170, %v214
    %v223 = vadd.f32 %v171, %v215
    %v224 = vadd.f32 %v172, %v216
    %v225 = vadd.f32 %v173, %v217
    %v226 = vadd.f32 %v174, %v218
    %v227 = vadd.f32 %v175, %v219
    %v228 = vadd.f32 %v176, %v220
    %229 = vset.pattern.permute.xlu0 3
    %230 = vperm.xlu0 %229, %v63
    %v231 = vpop.permute.xlu0 %230
    %233 = vset.pattern.permute.xlu0 3
    %234 = vperm.xlu0 %233, %v64
    %v235 = vpop.permute.xlu0 %234
    %237 = vset.pattern.permute.xlu0 3
    %238 = vperm.xlu0 %237, %v65
    %v239 = vpop.permute.xlu0 %238
    %241 = vset.pattern.permute.xlu0 3
    %242 = vperm.xlu0 %241, %v66
    %v243 = vpop.permute.xlu0 %242
    %245 = vset.pattern.permute.xlu0 3
    %246 = vperm.xlu0 %245, %v67
    %v247 = vpop.permute.xlu0 %246
    %249 = vset.pattern.permute.xlu0 3
    %250 = vperm.xlu0 %249, %v68
    %v251 = vpop.permute.xlu0 %250
    %253 = vset.pattern.permute.xlu0 3
    %254 = vperm.xlu0 %253, %v69
    %v255 = vpop.permute.xlu0 %254
    %257 = vset.pattern.permute.xlu0 3
    %258 = vperm.xlu0 %257, %v70
    %v259 = vpop.permute.xlu0 %258
    %v261 = vlaneseq
    %v262 = vshrl.u32 %v261, 7
    %v263 = vsub.s32 3, %v262
    %v264 = vrot.slane %v72, %v263
    %v265 = vmul.f32 %v231, %v264
    %v266 = vmul.f32 %v235, %v264
    %v267 = vmul.f32 %v239, %v264
    %v268 = vmul.f32 %v243, %v264
    %v269 = vmul.f32 %v247, %v264
    %v270 = vmul.f32 %v251, %v264
    %v271 = vmul.f32 %v255, %v264
    %v272 = vmul.f32 %v259, %v264
    %v273 = vadd.f32 %v221, %v265
    %v274 = vadd.f32 %v222, %v266
    %v275 = vadd.f32 %v223, %v267
    %v276 = vadd.f32 %v224, %v268
    %v277 = vadd.f32 %v225, %v269
    %v278 = vadd.f32 %v226, %v270
    %v279 = vadd.f32 %v227, %v271
    %v280 = vadd.f32 %v228, %v272
    %v281 = vld [vmem:[%s2] sm:$0x1]
    %v282 = vunpack.c.l.bf16 %v281
    %v283 = vlaneseq
    %v284 = vshrl.u32 %v283, 7
    %v285 = vsub.s32 0, %v284
    %v286 = vrot.slane %v282, %v285
    %v287 = vadd.f32 %v273, %v286
    %v288 = vadd.f32 %v274, %v286
    %v289 = vadd.f32 %v275, %v286
    %v290 = vadd.f32 %v276, %v286
    %v291 = vadd.f32 %v277, %v286
    %v292 = vadd.f32 %v278, %v286
    %v293 = vadd.f32 %v279, %v286
    %v294 = vadd.f32 %v280, %v286
    %v295 = vmax.f32 %v287, 0.0
    %v296 = vmax.f32 %v288, 0.0
    %v297 = vmax.f32 %v289, 0.0
    %v298 = vmax.f32 %v290, 0.0
    %v299 = vmax.f32 %v291, 0.0
    %v300 = vmax.f32 %v292, 0.0
    %v301 = vmax.f32 %v293, 0.0
    %v302 = vmax.f32 %v294, 0.0
    %v303 = vpack.c.bf16 %v296, %v295
    %v304 = vpack.c.bf16 %v298, %v297
    %v305 = vpack.c.bf16 %v300, %v299
    %v306 = vpack.c.bf16 %v302, %v301
    %v307 = vld [vmem:[#allocation2] sm:$0xf]
    %v308 = vld [vmem:[#allocation2 + $0x4] sm:$0xf]
    %v309 = vld [vmem:[#allocation2 + $0x8] sm:$0xf]
    %v310 = vld [vmem:[#allocation2 + $0xc] sm:$0xf]
    %v311 = vld [vmem:[#allocation2 + $0x10] sm:$0xf]
    %v312 = vld [vmem:[#allocation2 + $0x14] sm:$0xf]
    %v313 = vld [vmem:[#allocation2 + $0x18] sm:$0xf]
    %v314 = vld [vmem:[#allocation2 + $0x1c] sm:$0xf]
    %v315 = vld [vmem:[#allocation2 + $0x20] sm:$0xf]
    %v316 = vld [vmem:[#allocation2 + $0x24] sm:$0xf]
    %v317 = vld [vmem:[#allocation2 + $0x28] sm:$0xf]
    %v318 = vld [vmem:[#allocation2 + $0x2c] sm:$0xf]
    %v319 = vld [vmem:[#allocation2 + $0x30] sm:$0xf]
    %v320 = vld [vmem:[#allocation2 + $0x34] sm:$0xf]
    %v321 = vld [vmem:[#allocation2 + $0x38] sm:$0xf]
    %v322 = vld [vmem:[#allocation2 + $0x3c] sm:$0xf]
    %v323 = vld [vmem:[%s4] sm:$0x1]
    %v324 = vunpack.c.l.bf16 %v323
    %v325 = vlaneseq
    %v326 = vshrl.u32 %v325, 7
    %v327 = vsub.s32 0, %v326
    %v328 = vrot.slane %v324, %v327
    %v345 = vunpack.c.l.b16 %v307
    %v346 = vunpack.c.l.b16 %v308
    %v347 = vunpack.c.l.b16 %v309
    %v348 = vunpack.c.l.b16 %v310
    %v349 = vunpack.c.l.b16 %v311
    %v350 = vunpack.c.l.b16 %v312
    %v351 = vunpack.c.l.b16 %v313
    %v352 = vunpack.c.l.b16 %v314
    %v353 = vunpack.c.l.b16 %v315
    %v354 = vunpack.c.l.b16 %v316
    %v355 = vunpack.c.l.b16 %v317
    %v356 = vunpack.c.l.b16 %v318
    %v357 = vunpack.c.l.b16 %v319
    %v358 = vunpack.c.l.b16 %v320
    %v359 = vunpack.c.l.b16 %v321
    %v360 = vunpack.c.l.b16 %v322
    %v361 = vpack.c.b16 %v346, %v345
    %v362 = vpack.c.b16 %v348, %v347
    %v363 = vpack.c.b16 %v350, %v349
    %v364 = vpack.c.b16 %v352, %v351
    %v365 = vpack.c.b16 %v354, %v353
    %v366 = vpack.c.b16 %v356, %v355
    %v367 = vpack.c.b16 %v358, %v357
    %v368 = vpack.c.b16 %v360, %v359
    %377 = vmatprep.subr.bf16.mxu0 0
    %378 = vmatpush1.bf16.msra.mxu0 %v368
    %379 = vmatprep.subr.bf16.mxu0 0
    %380 = vmatpush1.bf16.msra.mxu0 %v367
    %381 = vmatprep.subr.bf16.mxu0 0
    %382 = vmatpush1.bf16.msra.mxu0 %v366
    %383 = vmatprep.subr.bf16.mxu0 0
    %384 = vmatpush1.bf16.msra.mxu0 %v365
    %385 = vmatprep.subr.bf16.mxu0 0
    %386 = vmatpush1.bf16.msra.mxu0 %v364
    %387 = vmatprep.subr.bf16.mxu0 0
    %388 = vmatpush1.bf16.msra.mxu0 %v363
    %389 = vmatprep.subr.bf16.mxu0 0
    %390 = vmatpush1.bf16.msra.mxu0 %v362
    %391 = vmatprep.subr.bf16.mxu0 0
    %392 = vmatpush1.bf16.msra.mxu0 %v361
    %393 = vmatprep.subr.bf16.mxu0 0
    %394 = vmatpush2.bf16.msra.mxu0 0
    %395 = vmatprep.subr.bf16.mxu0 0
    %396 = vmatpush2.bf16.msra.mxu0 0
    %397 = vmatprep.subr.bf16.mxu0 0
    %398 = vmatpush2.bf16.msra.mxu0 0
    %399 = vmatprep.subr.bf16.mxu0 0
    %400 = vmatpush2.bf16.msra.mxu0 0
    %401 = vmatprep.subr.bf16.mxu0 0
    %402 = vmatpush2.bf16.msra.mxu0 0
    %403 = vmatprep.subr.bf16.mxu0 0
    %404 = vmatpush2.bf16.msra.mxu0 0
    %405 = vmatprep.subr.bf16.mxu0 0
    %406 = vmatpush2.bf16.msra.mxu0 0
    %407 = vmatprep.subr.bf16.mxu0 0
    %408 = vmatpush2.bf16.msra.mxu0 0
    %409 = vmatprep.mubr.bf16.mxu0 0
    %410 = vmatmul.mubr.bf16.gmra.mxu0 %v303
    %v411 = vpop.f32.mrf.mxu0
    %v412 = vadd.f32 %v328, %v411
    %v413 = vpop.f32.mrf.mxu0
    %v414 = vpop.f32.mrf.mxu0
    %v415 = vadd.f32 %v328, %v414
    %v416 = vpop.f32.mrf.mxu0
    %417 = vmatprep.mubr.bf16.mxu0 0
    %418 = vmatmul.mubr.bf16.gmra.mxu0 %v304
    %v419 = vpop.f32.mrf.mxu0
    %v420 = vadd.f32 %v328, %v419
    %v421 = vpop.f32.mrf.mxu0
    %v422 = vpop.f32.mrf.mxu0
    %v423 = vadd.f32 %v328, %v422
    %v424 = vpop.f32.mrf.mxu0
    %425 = vmatprep.mubr.bf16.mxu0 0
    %426 = vmatmul.mubr.bf16.gmra.mxu0 %v305
    %v427 = vpop.f32.mrf.mxu0
    %v428 = vadd.f32 %v328, %v427
    %v429 = vpop.f32.mrf.mxu0
    %v430 = vpop.f32.mrf.mxu0
    %v431 = vadd.f32 %v328, %v430
    %v432 = vpop.f32.mrf.mxu0
    %433 = vmatprep.mubr.bf16.mxu0 0
    %434 = vmatmul.mubr.bf16.gmra.mxu0 %v306
    %v435 = vpop.f32.mrf.mxu0
    %v436 = vadd.f32 %v328, %v435
    %v437 = vpop.f32.mrf.mxu0
    %v438 = vpop.f32.mrf.mxu0
    %v439 = vadd.f32 %v328, %v438
    %v440 = vpop.f32.mrf.mxu0
    %441 = vdwg.mxu0
    %v442 = vmax.f32 %v412, 0.0
    %v443 = vmax.f32 %v415, 0.0
    %v444 = vmax.f32 %v420, 0.0
    %v445 = vmax.f32 %v423, 0.0
    %v446 = vmax.f32 %v428, 0.0
    %v447 = vmax.f32 %v431, 0.0
    %v448 = vmax.f32 %v436, 0.0
    %v449 = vmax.f32 %v439, 0.0
    %v450 = vpack.c.bf16 %v443, %v442
    %v451 = vpack.c.bf16 %v445, %v444
    %v452 = vpack.c.bf16 %v447, %v446
    %v453 = vpack.c.bf16 %v449, %v448
    %v454 = vld [vmem:[#allocation4] sm:$0xf]
    %v455 = vld [vmem:[#allocation4 + $0x4] sm:$0xf]
    %v456 = vld [vmem:[#allocation4 + $0x8] sm:$0xf]
    %v457 = vld [vmem:[#allocation4 + $0xc] sm:$0xf]
    %v458 = vld [vmem:[#allocation4 + $0x10] sm:$0xf]
    %v459 = vld [vmem:[#allocation4 + $0x14] sm:$0xf]
    %v460 = vld [vmem:[#allocation4 + $0x18] sm:$0xf]
    %v461 = vld [vmem:[#allocation4 + $0x1c] sm:$0xf]
    %v462 = vld [vmem:[#allocation4 + $0x20] sm:$0xf]
    %v463 = vld [vmem:[#allocation4 + $0x24] sm:$0xf]
    %v464 = vld [vmem:[#allocation4 + $0x28] sm:$0xf]
    %v465 = vld [vmem:[#allocation4 + $0x2c] sm:$0xf]
    %v466 = vld [vmem:[#allocation4 + $0x30] sm:$0xf]
    %v467 = vld [vmem:[#allocation4 + $0x34] sm:$0xf]
    %v468 = vld [vmem:[#allocation4 + $0x38] sm:$0xf]
    %v469 = vld [vmem:[#allocation4 + $0x3c] sm:$0xf]
    %v470 = vld [vmem:[%s6] sm:$0x1]
    %v471 = vunpack.c.l.bf16 %v470
    %v472 = vlaneseq
    %v473 = vshrl.u32 %v472, 7
    %v474 = vsub.s32 0, %v473
    %v475 = vrot.slane %v471, %v474
    %v492 = vunpack.c.l.b16 %v454
    %v493 = vunpack.c.l.b16 %v455
    %v494 = vunpack.c.l.b16 %v456
    %v495 = vunpack.c.l.b16 %v457
    %v496 = vunpack.c.l.b16 %v458
    %v497 = vunpack.c.l.b16 %v459
    %v498 = vunpack.c.l.b16 %v460
    %v499 = vunpack.c.l.b16 %v461
    %v500 = vunpack.c.l.b16 %v462
    %v501 = vunpack.c.l.b16 %v463
    %v502 = vunpack.c.l.b16 %v464
    %v503 = vunpack.c.l.b16 %v465
    %v504 = vunpack.c.l.b16 %v466
    %v505 = vunpack.c.l.b16 %v467
    %v506 = vunpack.c.l.b16 %v468
    %v507 = vunpack.c.l.b16 %v469
    %v508 = vpack.c.b16 %v493, %v492
    %v509 = vpack.c.b16 %v495, %v494
    %v510 = vpack.c.b16 %v497, %v496
    %v511 = vpack.c.b16 %v499, %v498
    %v512 = vpack.c.b16 %v501, %v500
    %v513 = vpack.c.b16 %v503, %v502
    %v514 = vpack.c.b16 %v505, %v504
    %v515 = vpack.c.b16 %v507, %v506
    %524 = vmatprep.subr.bf16.mxu0 0
    %525 = vmatpush1.bf16.msra.mxu0 %v515
    %526 = vmatprep.subr.bf16.mxu0 0
    %527 = vmatpush1.bf16.msra.mxu0 %v514
    %528 = vmatprep.subr.bf16.mxu0 0
    %529 = vmatpush1.bf16.msra.mxu0 %v513
    %530 = vmatprep.subr.bf16.mxu0 0
    %531 = vmatpush1.bf16.msra.mxu0 %v512
    %532 = vmatprep.subr.bf16.mxu0 0
    %533 = vmatpush1.bf16.msra.mxu0 %v511
    %534 = vmatprep.subr.bf16.mxu0 0
    %535 = vmatpush1.bf16.msra.mxu0 %v510
    %536 = vmatprep.subr.bf16.mxu0 0
    %537 = vmatpush1.bf16.msra.mxu0 %v509
    %538 = vmatprep.subr.bf16.mxu0 0
    %539 = vmatpush1.bf16.msra.mxu0 %v508
    %540 = vmatprep.subr.bf16.mxu0 0
    %541 = vmatpush2.bf16.msra.mxu0 0
    %542 = vmatprep.subr.bf16.mxu0 0
    %543 = vmatpush2.bf16.msra.mxu0 0
    %544 = vmatprep.subr.bf16.mxu0 0
    %545 = vmatpush2.bf16.msra.mxu0 0
    %546 = vmatprep.subr.bf16.mxu0 0
    %547 = vmatpush2.bf16.msra.mxu0 0
    %548 = vmatprep.subr.bf16.mxu0 0
    %549 = vmatpush2.bf16.msra.mxu0 0
    %550 = vmatprep.subr.bf16.mxu0 0
    %551 = vmatpush2.bf16.msra.mxu0 0
    %552 = vmatprep.subr.bf16.mxu0 0
    %553 = vmatpush2.bf16.msra.mxu0 0
    %554 = vmatprep.subr.bf16.mxu0 0
    %555 = vmatpush2.bf16.msra.mxu0 0
    %556 = vmatprep.mubr.bf16.mxu0 0
    %557 = vmatmul.mubr.bf16.gmra.mxu0 %v450
    %v558 = vpop.f32.mrf.mxu0
    %v559 = vadd.f32 %v475, %v558
    %v560 = vpop.f32.mrf.mxu0
    %v561 = vpop.f32.mrf.mxu0
    %v562 = vadd.f32 %v475, %v561
    %v563 = vpop.f32.mrf.mxu0
    %564 = vmatprep.mubr.bf16.mxu0 0
    %565 = vmatmul.mubr.bf16.gmra.mxu0 %v451
    %v566 = vpop.f32.mrf.mxu0
    %v567 = vadd.f32 %v475, %v566
    %v568 = vpop.f32.mrf.mxu0
    %v569 = vpop.f32.mrf.mxu0
    %v570 = vadd.f32 %v475, %v569
    %v571 = vpop.f32.mrf.mxu0
    %572 = vmatprep.mubr.bf16.mxu0 0
    %573 = vmatmul.mubr.bf16.gmra.mxu0 %v452
    %v574 = vpop.f32.mrf.mxu0
    %v575 = vadd.f32 %v475, %v574
    %v576 = vpop.f32.mrf.mxu0
    %v577 = vpop.f32.mrf.mxu0
    %v578 = vadd.f32 %v475, %v577
    %v579 = vpop.f32.mrf.mxu0
    %580 = vmatprep.mubr.bf16.mxu0 0
    %581 = vmatmul.mubr.bf16.gmra.mxu0 %v453
    %v582 = vpop.f32.mrf.mxu0
    %v583 = vadd.f32 %v475, %v582
    %v584 = vpop.f32.mrf.mxu0
    %v585 = vpop.f32.mrf.mxu0
    %v586 = vadd.f32 %v475, %v585
    %v587 = vpop.f32.mrf.mxu0
    %588 = vdwg.mxu0
    %vm589 = vcmask 15360
    %590 = vst.msk [vmem:[%s7] sm:$0xff] %vm589, %v559
    %591 = vst.msk [vmem:[%s7 + $0x8] sm:$0xff] %vm589, %v562
    %592 = vst.msk [vmem:[%s7 + $0x10] sm:$0xff] %vm589, %v567
    %593 = vst.msk [vmem:[%s7 + $0x18] sm:$0xff] %vm589, %v570
    %594 = vst.msk [vmem:[%s7 + $0x20] sm:$0xff] %vm589, %v575
    %595 = vst.msk [vmem:[%s7 + $0x28] sm:$0xff] %vm589, %v578
    %596 = vst.msk [vmem:[%s7 + $0x30] sm:$0xff] %vm589, %v583
    %597 = vst.msk [vmem:[%s7 + $0x38] sm:$0xff] %vm589, %v586
    // Predicated region
    $region38: #{qnetwork_forward.1} parent=1 // pred_check
      _
    $region39: #{qnetwork_forward.1} parent=1 // pred_check_branch
      %599 = sbr.rel (0) target = $region41
    $region40: #{qnetwork_forward.1} parent=1 // pred_region
      _
    $region41: #{qnetwork_forward.1} parent=1 // pred_fallthru
      _
    // Predicated region
    $region42: #{qnetwork_forward.1} parent=1 // pred_check
      _
    $region43: #{qnetwork_forward.1} parent=1 // pred_check_branch
      %601 = sbr.rel (0) target = $region45
    $region44: #{qnetwork_forward.1} parent=1 // pred_region
      _
    $region45: #{qnetwork_forward.1} parent=1 // pred_fallthru
      _
    %602 = vsyncpa [#allocation3], 1
    %603 = vsyncpa [#allocation5], 1

</llo_original>
